<compile_context>
chip_gen: v7x
topology: tpu7x:2x2x1
jax: 0.10.0
libtpu: 0.0.40
codegen_flags: <defaults>
</compile_context>

<pallas_src>
import jax
import jax.numpy as jnp
from jax import lax
from jax.experimental import pallas as pl
from jax.experimental.pallas import tpu as pltpu


def _round_up(x: int, m: int) -> int:
    return -(-x // m) * m


def _vmem_capacity_bytes() -> int:
    try:
        return int(pltpu.get_tpu_info().vmem_capacity_bytes)
    except Exception:
        return 64 << 20  # conservative: v7x per-TensorCore physical VMEM


def _make_resident_kernel(tb: int, use_bias: bool):
    """Tables are VMEM-resident; gather = in-kernel dynamic-slice row copies."""

    def kernel(uidx_ref, iidx_ref, utab_ref, itab_ref, *rest):
        if use_bias:
            bias_ref, o_ref, u_buf, v_buf = rest
        else:
            o_ref, u_buf, v_buf = rest

        base = pl.program_id(0) * tb

        def gather(r, carry):
            u = uidx_ref[base + r]
            i = iidx_ref[base + r]
            u_buf[pl.ds(r, 1), :] = utab_ref[pl.ds(u, 1), :]
            v_buf[pl.ds(r, 1), :] = itab_ref[pl.ds(i, 1), :]
            return carry

        lax.fori_loop(0, tb, gather, 0, unroll=8)

        # diag(U @ V^T)[i] == sum_f U[i,f] * V[i,f]   (VPU mul + lane reduce)
        dot = jnp.sum(u_buf[...] * v_buf[...], axis=-1, keepdims=True)  # (tb, 1)
        if use_bias:
            dot = dot + bias_ref[...]
        o_ref[...] = dot

    return kernel


def _make_hbm_gather_kernel(tb: int, use_bias: bool):
    """Tables stay in HBM; per-row DMA gather, one wait per table."""

    def kernel(uidx_ref, iidx_ref, user_hbm, item_hbm, *rest):
        if use_bias:
            bias_ref, o_ref, u_buf, v_buf, sem = rest
        else:
            o_ref, u_buf, v_buf, sem = rest

        base = pl.program_id(0) * tb

        # Issue all row-gather DMAs for this tile (all concurrently in flight).
        # Unrolled so DMA starts / address math get scheduled efficiently; all
        # SMEM index reads happen before any wait.
        def issue(r, carry):
            u = uidx_ref[base + r]
            i = iidx_ref[base + r]
            pltpu.make_async_copy(user_hbm.at[pl.ds(u, 1)],
                                  u_buf.at[pl.ds(r, 1)], sem.at[0]).start()
            pltpu.make_async_copy(item_hbm.at[pl.ds(i, 1)],
                                  v_buf.at[pl.ds(r, 1)], sem.at[1]).start()
            return carry

        lax.fori_loop(0, tb, issue, 0, unroll=8)

        # Single wait per table: the descriptor covers the whole (tb, feat)
        # destination buffer, i.e. tb*feat*4 bytes == the summed bytes of the
        # tb one-row copies issued above (DMA semaphores count bytes).
        pltpu.make_async_copy(u_buf, u_buf, sem.at[0]).wait()
        pltpu.make_async_copy(v_buf, v_buf, sem.at[1]).wait()

        dot = jnp.sum(u_buf[...] * v_buf[...], axis=-1, keepdims=True)  # (tb, 1)
        if use_bias:
            dot = dot + bias_ref[...]
        o_ref[...] = dot

    return kernel


def matrix_factorization_forward(user_table, item_table, users, items,
                                 bias_user=None, bias_item=None, o_avg=None,
                                 c_score=None, use_bias=False,
                                 use_confidence=False, tile_rows=1024,
                                 force_hbm_gather=False):
    """Equivalent of MatrixFactorization.forward.  Returns (B,) float32."""
    if use_confidence:
        # TODO(synk): the reference applies torch.bmm to a 1-D result, which is
        # ill-typed in PyTorch itself; there is nothing well-defined to implement.
        raise NotImplementedError("use_confidence=True has no well-defined semantics")

    user_table = jnp.asarray(user_table, jnp.float32)
    item_table = jnp.asarray(item_table, jnp.float32)
    users_idx = jnp.asarray(users, jnp.int32).reshape(-1)
    items_idx = jnp.asarray(items, jnp.int32).reshape(-1)
    batch = users_idx.shape[0]
    num_u, feat = user_table.shape
    num_i = item_table.shape[0]

    vmem_cap = _vmem_capacity_bytes()

    # --- tile selection --------------------------------------------------
    # Gather scratch (2 buffers of (tb, feat) f32) capped at ~1/8 of VMEM.
    tb_vmem_cap = max(8, ((vmem_cap // 8) // (2 * feat * 4)) // 8 * 8)
    b8 = _round_up(batch, 8)
    tb = max(8, min((int(tile_rows) // 8) * 8, tb_vmem_cap, b8))
    if b8 >= 16:
        # keep >= 2 grid steps so the "parallel" batch axis can use both
        # TensorCores on v7x (no effect on v5e/v6e).
        tb = max(8, min(tb, _round_up(-(-b8 // 2), 8)))
    b_pad = _round_up(batch, tb)
    pad = b_pad - batch
    if pad:
        # index 0 is a safe padding row (tables are non-empty by construction).
        users_idx = jnp.concatenate([users_idx, jnp.zeros((pad,), jnp.int32)])
        items_idx = jnp.concatenate([items_idx, jnp.zeros((pad,), jnp.int32)])

    # --- path dispatch & VMEM budget --------------------------------------
    table_bytes = (num_u + num_i) * feat * 4
    scratch_bytes = 2 * tb * feat * 4
    # x2 on tables: BlockSpec inputs are double-buffered even for constant maps.
    resident = (not force_hbm_gather) and \
        (2 * table_bytes + scratch_bytes + (4 << 20)) <= int(0.6 * vmem_cap)

    need = scratch_bytes + (2 * table_bytes if resident else 0) + (4 << 20)
    vmem_limit = int(min(max(need + (8 << 20), 16 << 20), int(0.95 * vmem_cap)))

    # --- specs -------------------------------------------------------------
    if resident:
        in_specs = [
            pl.BlockSpec((num_u, feat), lambda t, u, i: (0, 0)),
            pl.BlockSpec((num_i, feat), lambda t, u, i: (0, 0)),
        ]
        scratch_shapes = [pltpu.VMEM((tb, feat), jnp.float32),
                          pltpu.VMEM((tb, feat), jnp.float32)]
        kernel = _make_resident_kernel(tb, use_bias)
    else:
        in_specs = [pl.BlockSpec(memory_space=pl.ANY),
                    pl.BlockSpec(memory_space=pl.ANY)]
        scratch_shapes = [pltpu.VMEM((tb, feat), jnp.float32),
                          pltpu.VMEM((tb, feat), jnp.float32),
                          pltpu.SemaphoreType.DMA((2,))]
        kernel = _make_hbm_gather_kernel(tb, use_bias)

    args = [users_idx, items_idx, user_table, item_table]

    if use_bias:
        bias = (jnp.asarray(bias_user, jnp.float32).reshape(-1)
                + jnp.asarray(bias_item, jnp.float32).reshape(-1)
                + jnp.asarray(o_avg, jnp.float32))
        bias = jnp.broadcast_to(bias, (batch,)).reshape(batch, 1)
        if pad:
            bias = jnp.concatenate([bias, jnp.zeros((pad, 1), jnp.float32)], axis=0)
        in_specs.append(pl.BlockSpec((tb, 1), lambda t, u, i: (t, 0)))
        args.append(bias)

    # NOTE: index arrays are scalar-prefetched into SMEM; for very large
    # production batches these could instead be passed as per-tile SMEM blocks.
    out = pl.pallas_call(
        kernel,
        out_shape=jax.ShapeDtypeStruct((b_pad, 1), jnp.float32),
        grid_spec=pltpu.PrefetchScalarGridSpec(
            num_scalar_prefetch=2,
            grid=(b_pad // tb,),
            in_specs=in_specs,
            out_specs=pl.BlockSpec((tb, 1), lambda t, u, i: (t, 0)),
            scratch_shapes=scratch_shapes),
        compiler_params=pltpu.CompilerParams(
            dimension_semantics=("parallel",),
            vmem_limit_bytes=vmem_limit),
    )(*args)

    return out[:batch, 0]


if __name__ == "__main__":
    num_users, num_items, num_factors = 16, 32, 32

    key = jax.random.PRNGKey(0)
    k_u, k_i, k_us, k_it, k_bu, k_bi = jax.random.split(key, 6)

    # The torch module initializes embeddings with ones_; random tables keep the
    # correctness check non-degenerate (weights are synthetic either way).
    user_table = jax.random.normal(k_u, (num_users, num_factors), jnp.float32)
    item_table = jax.random.normal(k_i, (num_items, num_factors), jnp.float32)

    # --- check 1: default path (use_bias=False), resident-table fast path ----
    B1 = 8
    users1 = jax.random.randint(k_us, (B1, 1), 0, num_users, jnp.int32)
    items1 = jax.random.randint(k_it, (B1, 1), 0, num_items, jnp.int32)
    got1 = jax.block_until_ready(
        matrix_factorization_forward(user_table, item_table, users1, items1))
    u1 = jnp.take(user_table, users1.reshape(-1), axis=0)
    v1 = jnp.take(item_table, items1.reshape(-1), axis=0)
    ref1 = jnp.diagonal(u1 @ v1.T)
    assert got1.shape == (B1,)
    assert jnp.allclose(got1, ref1, atol=1e-5, rtol=1e-5), (got1, ref1)

    # --- check 2: use_bias=True with a ragged batch (exercises padding) ------
    B2 = 5
    users2 = users1[:B2]
    items2 = items1[:B2]
    bias_user = jax.random.normal(k_bu, (B2,), jnp.float32)
    bias_item = jax.random.normal(k_bi, (B2,), jnp.float32)
    o_avg = jnp.float32(0.25)
    got2 = jax.block_until_ready(
        matrix_factorization_forward(user_table, item_table, users2, items2,
                                     bias_user, bias_item, o_avg,
                                     use_bias=True))
    u2 = jnp.take(user_table, users2.reshape(-1), axis=0)
    v2 = jnp.take(item_table, items2.reshape(-1), axis=0)
    ref2 = jnp.diagonal(u2 @ v2.T) + bias_user + bias_item + o_avg
    assert got2.shape == (B2,)
    assert jnp.allclose(got2, ref2, atol=1e-5, rtol=1e-5), (got2, ref2)

    # --- check 3: force the HBM DMA-gather path (large-table code path) ------
    got3 = jax.block_until_ready(
        matrix_factorization_forward(user_table, item_table, users1, items1,
                                     force_hbm_gather=True))
    assert got3.shape == (B1,)
    assert jnp.allclose(got3, ref1, atol=1e-5, rtol=1e-5), (got3, ref1)

    print("KERNEL_OK")
</pallas_src>

<mosaic_0001>
module attributes {stable_mosaic.version = 11 : i64} {
  func.func @kernel(%arg0: i32, %arg1: memref<8xi32, #tpu.memory_space<smem>>, %arg2: memref<8xi32, #tpu.memory_space<smem>>, %arg3: memref<16x32xf32, #tpu.memory_space<vmem>>, %arg4: memref<32x32xf32, #tpu.memory_space<vmem>>, %arg5: memref<8x1xf32, #tpu.memory_space<vmem>>, %arg6: memref<8x32xf32, #tpu.memory_space<vmem>>, %arg7: memref<8x32xf32, #tpu.memory_space<vmem>>) attributes {dimension_semantics = [#tpu.dimension_semantics<parallel>], iteration_bounds = array<i64: 1>, scalar_prefetch = 2 : i64, scratch_operands = 2 : i64, tpu.core_type = #tpu.core_type<tc>, window_params = [{pipeline_mode = #tpu.pipeline_mode<synchronous>, transform_indices = @transform_0, window_bounds = array<i64: 16, 32>}, {pipeline_mode = #tpu.pipeline_mode<synchronous>, transform_indices = @transform_1, window_bounds = array<i64: 32, 32>}, {transform_indices = @transform_2, window_bounds = array<i64: 8, 1>}]} {
    %c8_i32 = arith.constant 8 : i32
    %0 = arith.muli %arg0, %c8_i32 : i32
    %c0_i32 = arith.constant 0 : i32
    %1 = arith.addi %0, %c0_i32 : i32
    %2 = arith.index_cast %1 : i32 to index
    %3 = memref.load %arg1[%2] : memref<8xi32, #tpu.memory_space<smem>>
    %4 = arith.addi %0, %c0_i32 : i32
    %5 = arith.index_cast %4 : i32 to index
    %6 = memref.load %arg2[%5] : memref<8xi32, #tpu.memory_space<smem>>
    %7 = arith.index_cast %3 : i32 to index
    %c0 = arith.constant 0 : index
    %8 = vector.load %arg3[%7, %c0] : memref<16x32xf32, #tpu.memory_space<vmem>>, vector<1x32xf32>
    %9 = arith.index_cast %c0_i32 : i32 to index
    %c0_0 = arith.constant 0 : index
    %10 = vector.load %arg6[%9, %c0_0] : memref<8x32xf32, #tpu.memory_space<vmem>>, vector<1x32xf32>
    tpu.vector_store %arg6[%9, %c0_0], %8 {strides = array<i32>} : memref<8x32xf32, #tpu.memory_space<vmem>>, vector<1x32xf32>,
    %11 = arith.index_cast %6 : i32 to index
    %c0_1 = arith.constant 0 : index
    %12 = vector.load %arg4[%11, %c0_1] : memref<32x32xf32, #tpu.memory_space<vmem>>, vector<1x32xf32>
    %13 = arith.index_cast %c0_i32 : i32 to index
    %c0_2 = arith.constant 0 : index
    %14 = vector.load %arg7[%13, %c0_2] : memref<8x32xf32, #tpu.memory_space<vmem>>, vector<1x32xf32>
    tpu.vector_store %arg7[%13, %c0_2], %12 {strides = array<i32>} : memref<8x32xf32, #tpu.memory_space<vmem>>, vector<1x32xf32>,
    %c1_i32 = arith.constant 1 : i32
    %15 = arith.addi %0, %c1_i32 : i32
    %16 = arith.index_cast %15 : i32 to index
    %17 = memref.load %arg1[%16] : memref<8xi32, #tpu.memory_space<smem>>
    %18 = arith.addi %0, %c1_i32 : i32
    %19 = arith.index_cast %18 : i32 to index
    %20 = memref.load %arg2[%19] : memref<8xi32, #tpu.memory_space<smem>>
    %21 = arith.index_cast %17 : i32 to index
    %c0_3 = arith.constant 0 : index
    %22 = vector.load %arg3[%21, %c0_3] : memref<16x32xf32, #tpu.memory_space<vmem>>, vector<1x32xf32>
    %23 = arith.index_cast %c1_i32 : i32 to index
    %c0_4 = arith.constant 0 : index
    %24 = vector.load %arg6[%23, %c0_4] : memref<8x32xf32, #tpu.memory_space<vmem>>, vector<1x32xf32>
    tpu.vector_store %arg6[%23, %c0_4], %22 {strides = array<i32>} : memref<8x32xf32, #tpu.memory_space<vmem>>, vector<1x32xf32>,
    %25 = arith.index_cast %20 : i32 to index
    %c0_5 = arith.constant 0 : index
    %26 = vector.load %arg4[%25, %c0_5] : memref<32x32xf32, #tpu.memory_space<vmem>>, vector<1x32xf32>
    %27 = arith.index_cast %c1_i32 : i32 to index
    %c0_6 = arith.constant 0 : index
    %28 = vector.load %arg7[%27, %c0_6] : memref<8x32xf32, #tpu.memory_space<vmem>>, vector<1x32xf32>
    tpu.vector_store %arg7[%27, %c0_6], %26 {strides = array<i32>} : memref<8x32xf32, #tpu.memory_space<vmem>>, vector<1x32xf32>,
    %c2_i32 = arith.constant 2 : i32
    %29 = arith.addi %0, %c2_i32 : i32
    %30 = arith.index_cast %29 : i32 to index
    %31 = memref.load %arg1[%30] : memref<8xi32, #tpu.memory_space<smem>>
    %32 = arith.addi %0, %c2_i32 : i32
    %33 = arith.index_cast %32 : i32 to index
    %34 = memref.load %arg2[%33] : memref<8xi32, #tpu.memory_space<smem>>
    %35 = arith.index_cast %31 : i32 to index
    %c0_7 = arith.constant 0 : index
    %36 = vector.load %arg3[%35, %c0_7] : memref<16x32xf32, #tpu.memory_space<vmem>>, vector<1x32xf32>
    %37 = arith.index_cast %c2_i32 : i32 to index
    %c0_8 = arith.constant 0 : index
    %38 = vector.load %arg6[%37, %c0_8] : memref<8x32xf32, #tpu.memory_space<vmem>>, vector<1x32xf32>
    tpu.vector_store %arg6[%37, %c0_8], %36 {strides = array<i32>} : memref<8x32xf32, #tpu.memory_space<vmem>>, vector<1x32xf32>,
    %39 = arith.index_cast %34 : i32 to index
    %c0_9 = arith.constant 0 : index
    %40 = vector.load %arg4[%39, %c0_9] : memref<32x32xf32, #tpu.memory_space<vmem>>, vector<1x32xf32>
    %41 = arith.index_cast %c2_i32 : i32 to index
    %c0_10 = arith.constant 0 : index
    %42 = vector.load %arg7[%41, %c0_10] : memref<8x32xf32, #tpu.memory_space<vmem>>, vector<1x32xf32>
    tpu.vector_store %arg7[%41, %c0_10], %40 {strides = array<i32>} : memref<8x32xf32, #tpu.memory_space<vmem>>, vector<1x32xf32>,
    %c3_i32 = arith.constant 3 : i32
    %43 = arith.addi %0, %c3_i32 : i32
    %44 = arith.index_cast %43 : i32 to index
    %45 = memref.load %arg1[%44] : memref<8xi32, #tpu.memory_space<smem>>
    %46 = arith.addi %0, %c3_i32 : i32
    %47 = arith.index_cast %46 : i32 to index
    %48 = memref.load %arg2[%47] : memref<8xi32, #tpu.memory_space<smem>>
    %49 = arith.index_cast %45 : i32 to index
    %c0_11 = arith.constant 0 : index
    %50 = vector.load %arg3[%49, %c0_11] : memref<16x32xf32, #tpu.memory_space<vmem>>, vector<1x32xf32>
    %51 = arith.index_cast %c3_i32 : i32 to index
    %c0_12 = arith.constant 0 : index
    %52 = vector.load %arg6[%51, %c0_12] : memref<8x32xf32, #tpu.memory_space<vmem>>, vector<1x32xf32>
    tpu.vector_store %arg6[%51, %c0_12], %50 {strides = array<i32>} : memref<8x32xf32, #tpu.memory_space<vmem>>, vector<1x32xf32>,
    %53 = arith.index_cast %48 : i32 to index
    %c0_13 = arith.constant 0 : index
    %54 = vector.load %arg4[%53, %c0_13] : memref<32x32xf32, #tpu.memory_space<vmem>>, vector<1x32xf32>
    %55 = arith.index_cast %c3_i32 : i32 to index
    %c0_14 = arith.constant 0 : index
    %56 = vector.load %arg7[%55, %c0_14] : memref<8x32xf32, #tpu.memory_space<vmem>>, vector<1x32xf32>
    tpu.vector_store %arg7[%55, %c0_14], %54 {strides = array<i32>} : memref<8x32xf32, #tpu.memory_space<vmem>>, vector<1x32xf32>,
    %c4_i32 = arith.constant 4 : i32
    %57 = arith.addi %0, %c4_i32 : i32
    %58 = arith.index_cast %57 : i32 to index
    %59 = memref.load %arg1[%58] : memref<8xi32, #tpu.memory_space<smem>>
    %60 = arith.addi %0, %c4_i32 : i32
    %61 = arith.index_cast %60 : i32 to index
    %62 = memref.load %arg2[%61] : memref<8xi32, #tpu.memory_space<smem>>
    %63 = arith.index_cast %59 : i32 to index
    %c0_15 = arith.constant 0 : index
    %64 = vector.load %arg3[%63, %c0_15] : memref<16x32xf32, #tpu.memory_space<vmem>>, vector<1x32xf32>
    %65 = arith.index_cast %c4_i32 : i32 to index
    %c0_16 = arith.constant 0 : index
    %66 = vector.load %arg6[%65, %c0_16] : memref<8x32xf32, #tpu.memory_space<vmem>>, vector<1x32xf32>
    tpu.vector_store %arg6[%65, %c0_16], %64 {strides = array<i32>} : memref<8x32xf32, #tpu.memory_space<vmem>>, vector<1x32xf32>,
    %67 = arith.index_cast %62 : i32 to index
    %c0_17 = arith.constant 0 : index
    %68 = vector.load %arg4[%67, %c0_17] : memref<32x32xf32, #tpu.memory_space<vmem>>, vector<1x32xf32>
    %69 = arith.index_cast %c4_i32 : i32 to index
    %c0_18 = arith.constant 0 : index
    %70 = vector.load %arg7[%69, %c0_18] : memref<8x32xf32, #tpu.memory_space<vmem>>, vector<1x32xf32>
    tpu.vector_store %arg7[%69, %c0_18], %68 {strides = array<i32>} : memref<8x32xf32, #tpu.memory_space<vmem>>, vector<1x32xf32>,
    %c5_i32 = arith.constant 5 : i32
    %71 = arith.addi %0, %c5_i32 : i32
    %72 = arith.index_cast %71 : i32 to index
    %73 = memref.load %arg1[%72] : memref<8xi32, #tpu.memory_space<smem>>
    %74 = arith.addi %0, %c5_i32 : i32
    %75 = arith.index_cast %74 : i32 to index
    %76 = memref.load %arg2[%75] : memref<8xi32, #tpu.memory_space<smem>>
    %77 = arith.index_cast %73 : i32 to index
    %c0_19 = arith.constant 0 : index
    %78 = vector.load %arg3[%77, %c0_19] : memref<16x32xf32, #tpu.memory_space<vmem>>, vector<1x32xf32>
    %79 = arith.index_cast %c5_i32 : i32 to index
    %c0_20 = arith.constant 0 : index
    %80 = vector.load %arg6[%79, %c0_20] : memref<8x32xf32, #tpu.memory_space<vmem>>, vector<1x32xf32>
    tpu.vector_store %arg6[%79, %c0_20], %78 {strides = array<i32>} : memref<8x32xf32, #tpu.memory_space<vmem>>, vector<1x32xf32>,
    %81 = arith.index_cast %76 : i32 to index
    %c0_21 = arith.constant 0 : index
    %82 = vector.load %arg4[%81, %c0_21] : memref<32x32xf32, #tpu.memory_space<vmem>>, vector<1x32xf32>
    %83 = arith.index_cast %c5_i32 : i32 to index
    %c0_22 = arith.constant 0 : index
    %84 = vector.load %arg7[%83, %c0_22] : memref<8x32xf32, #tpu.memory_space<vmem>>, vector<1x32xf32>
    tpu.vector_store %arg7[%83, %c0_22], %82 {strides = array<i32>} : memref<8x32xf32, #tpu.memory_space<vmem>>, vector<1x32xf32>,
    %c6_i32 = arith.constant 6 : i32
    %85 = arith.addi %0, %c6_i32 : i32
    %86 = arith.index_cast %85 : i32 to index
    %87 = memref.load %arg1[%86] : memref<8xi32, #tpu.memory_space<smem>>
    %88 = arith.addi %0, %c6_i32 : i32
    %89 = arith.index_cast %88 : i32 to index
    %90 = memref.load %arg2[%89] : memref<8xi32, #tpu.memory_space<smem>>
    %91 = arith.index_cast %87 : i32 to index
    %c0_23 = arith.constant 0 : index
    %92 = vector.load %arg3[%91, %c0_23] : memref<16x32xf32, #tpu.memory_space<vmem>>, vector<1x32xf32>
    %93 = arith.index_cast %c6_i32 : i32 to index
    %c0_24 = arith.constant 0 : index
    %94 = vector.load %arg6[%93, %c0_24] : memref<8x32xf32, #tpu.memory_space<vmem>>, vector<1x32xf32>
    tpu.vector_store %arg6[%93, %c0_24], %92 {strides = array<i32>} : memref<8x32xf32, #tpu.memory_space<vmem>>, vector<1x32xf32>,
    %95 = arith.index_cast %90 : i32 to index
    %c0_25 = arith.constant 0 : index
    %96 = vector.load %arg4[%95, %c0_25] : memref<32x32xf32, #tpu.memory_space<vmem>>, vector<1x32xf32>
    %97 = arith.index_cast %c6_i32 : i32 to index
    %c0_26 = arith.constant 0 : index
    %98 = vector.load %arg7[%97, %c0_26] : memref<8x32xf32, #tpu.memory_space<vmem>>, vector<1x32xf32>
    tpu.vector_store %arg7[%97, %c0_26], %96 {strides = array<i32>} : memref<8x32xf32, #tpu.memory_space<vmem>>, vector<1x32xf32>,
    %c7_i32 = arith.constant 7 : i32
    %99 = arith.addi %0, %c7_i32 : i32
    %100 = arith.index_cast %99 : i32 to index
    %101 = memref.load %arg1[%100] : memref<8xi32, #tpu.memory_space<smem>>
    %102 = arith.addi %0, %c7_i32 : i32
    %103 = arith.index_cast %102 : i32 to index
    %104 = memref.load %arg2[%103] : memref<8xi32, #tpu.memory_space<smem>>
    %105 = arith.index_cast %101 : i32 to index
    %c0_27 = arith.constant 0 : index
    %106 = vector.load %arg3[%105, %c0_27] : memref<16x32xf32, #tpu.memory_space<vmem>>, vector<1x32xf32>
    %107 = arith.index_cast %c7_i32 : i32 to index
    %c0_28 = arith.constant 0 : index
    %108 = vector.load %arg6[%107, %c0_28] : memref<8x32xf32, #tpu.memory_space<vmem>>, vector<1x32xf32>
    tpu.vector_store %arg6[%107, %c0_28], %106 {strides = array<i32>} : memref<8x32xf32, #tpu.memory_space<vmem>>, vector<1x32xf32>,
    %109 = arith.index_cast %104 : i32 to index
    %c0_29 = arith.constant 0 : index
    %110 = vector.load %arg4[%109, %c0_29] : memref<32x32xf32, #tpu.memory_space<vmem>>, vector<1x32xf32>
    %111 = arith.index_cast %c7_i32 : i32 to index
    %c0_30 = arith.constant 0 : index
    %112 = vector.load %arg7[%111, %c0_30] : memref<8x32xf32, #tpu.memory_space<vmem>>, vector<1x32xf32>
    tpu.vector_store %arg7[%111, %c0_30], %110 {strides = array<i32>} : memref<8x32xf32, #tpu.memory_space<vmem>>, vector<1x32xf32>,
    %c8_i32_31 = arith.constant 8 : i32
    %c0_32 = arith.constant 0 : index
    %c0_33 = arith.constant 0 : index
    %113 = vector.load %arg6[%c0_32, %c0_33] : memref<8x32xf32, #tpu.memory_space<vmem>>, vector<8x32xf32>
    %c0_34 = arith.constant 0 : index
    %c0_35 = arith.constant 0 : index
    %114 = vector.load %arg7[%c0_34, %c0_35] : memref<8x32xf32, #tpu.memory_space<vmem>>, vector<8x32xf32>
    %115 = arith.mulf %113, %114 : vector<8x32xf32>
    %cst = arith.constant dense<0.000000e+00> : vector<8xf32>
    %116 = vector.multi_reduction <add>, %115, %cst [1] : vector<8x32xf32> to vector<8xf32>
    %117 = vector.shape_cast %116 : vector<8xf32> to vector<8x1xf32>
    %c0_36 = arith.constant 0 : index
    %c0_37 = arith.constant 0 : index
    %118 = vector.load %arg5[%c0_36, %c0_37] : memref<8x1xf32, #tpu.memory_space<vmem>>, vector<8x1xf32>
    tpu.vector_store %arg5[%c0_36, %c0_37], %117 {strides = array<i32>} : memref<8x1xf32, #tpu.memory_space<vmem>>, vector<8x1xf32>,
    return
  }
  func.func @transform_0(%arg0: i32, %arg1: memref<8xi32, #tpu.memory_space<smem>>, %arg2: memref<8xi32, #tpu.memory_space<smem>>) -> (i32, i32) {
    %c0_i32 = arith.constant 0 : i32
    %c0_i32_0 = arith.constant 0 : i32
    %c0_i32_1 = arith.constant 0 : i32
    return %c0_i32, %c0_i32_0 : i32, i32
  }
  func.func @transform_1(%arg0: i32, %arg1: memref<8xi32, #tpu.memory_space<smem>>, %arg2: memref<8xi32, #tpu.memory_space<smem>>) -> (i32, i32) {
    %c0_i32 = arith.constant 0 : i32
    %c0_i32_0 = arith.constant 0 : i32
    %c0_i32_1 = arith.constant 0 : i32
    return %c0_i32, %c0_i32_0 : i32, i32
  }
  func.func @transform_2(%arg0: i32, %arg1: memref<8xi32, #tpu.memory_space<smem>>, %arg2: memref<8xi32, #tpu.memory_space<smem>>) -> (i32, i32) {
    %c0_i32 = arith.constant 0 : i32
    %c0_i32_0 = arith.constant 0 : i32
    return %arg0, %c0_i32 : i32, i32
  }
}

</mosaic_0001>

<llo_original>
// kernel: tpu_custom_call.1
$region0: #{tpu_custom_call.1}
  #allocation0 [shape = 'u32[]', space=smem, size = 0x4, offset = 0x4, fixed_abs, tag = 'smem constant byte address 0x4 - core index']
  #allocation1 [shape = 'u32[144,128]{1,0:T(1,128)}', space=vmem, size = 0x12000, scoped, tag = 'internal scratch']
  #allocation2 [shape = 'f32[8,32]{1,0:T(8,128)}', space=vmem, size = 0x1000, scoped, tag = 'scratch operand']
  #allocation3 [shape = 'f32[8,32]{1,0:T(8,128)}', space=vmem, size = 0x1000, scoped, tag = 'scratch operand']
  #allocation4 [shape = 's32[1]{0}', space=sflag, size = 0x4, scoped, tag = 'scoped memory for tpu_custom_call.1']
  #allocation5 [shape = 'u8[512]{0}', space=smem, size = 0x200, scoped, tag = 'prefetched SMEM operand 0']
  #allocation6 [shape = 'u8[512]{0}', space=smem, size = 0x200, scoped, tag = 'prefetched SMEM operand 1']
  %s0 = inlined_call_operand.hbm [shape: s32[8], index: 0, kind: input, shape index: {}]
  %s1 = inlined_call_operand.vmem [shape: s32[8], index: 1, kind: input, shape index: {}]
  %s2 = inlined_call_operand.hbm [shape: f32[16,32], index: 2, kind: input, shape index: {}]
  %s3 = inlined_call_operand.hbm [shape: f32[32,32], index: 3, kind: input, shape index: {}]
  %s4 = inlined_call_operand.vmem [shape: f32[8,1], index: 4, kind: output, shape index: {}]
  %s5 = sld [smem:[#allocation0]]
  $region26: #{tpu_custom_call.1} parent=0
    _
  %s7 = ssub.s32 1, %s5
  %s8 = scalar_select 0, %s7, %s5
  %10 = dma.hbm_to_smem %s0, 16, [#allocation5], [#allocation4]
  %s11 = sshll.u32 %s1, 4
  %s12 = int_to_ptr.vmem [resolvable:$true] %s11
  %14 = dma.vmem_to_smem %s12, 16, [#allocation6], [#allocation4]
  %15 = dma.done [#allocation4], 32
  %16 = sfence
  $region1: #{tpu_custom_call.1} parent=0
    #allocation7 [shape = 'u8[8192]{0}', space=vmem, size = 0x2000, scoped, tag = 'input window, operand 2, single buffered']
    #allocation8 [shape = 's32[1]{0}', space=sflag, size = 0x4, scoped, tag = 'scoped memory for tpu_custom_call.1']
    #allocation9 [shape = 'u8[16384]{0}', space=vmem, size = 0x4000, scoped, tag = 'input window, operand 3, single buffered']
    #allocation10 [shape = 's32[1]{0}', space=sflag, size = 0x4, scoped, tag = 'scoped memory for tpu_custom_call.1']
    %17 = vsyncpa [#allocation8], 0
    %18 = vsyncpa [#allocation10], 0
    // Predicated region
    $region2: #{tpu_custom_call.1} parent=1 // pred_check
      _
    $region3: #{tpu_custom_call.1} parent=1 // pred_check_branch
      %20 = sbr.rel (0) target = $region5
    $region4: #{tpu_custom_call.1} parent=1 // pred_region
      %s22 = ssub.s32 256, 256
      %23 = vsyncadd [#allocation8], %s22
      %s24 = sshll.u32 [#allocation7], 4
      %s25 = int_to_ptr.vmem [resolvable:$true] %s24
      %30 = dma.hbm_to_vmem [thread:$0]  %s2, 256, %s25, [#allocation8], 128, 128, 8
    $region5: #{tpu_custom_call.1} parent=1 // pred_fallthru
      _
    // Predicated region
    $region6: #{tpu_custom_call.1} parent=1 // pred_check
      _
    $region7: #{tpu_custom_call.1} parent=1 // pred_check_branch
      %32 = sbr.rel (0) target = $region9
    $region8: #{tpu_custom_call.1} parent=1 // pred_region
      %s34 = ssub.s32 512, 512
      %35 = vsyncadd [#allocation10], %s34
      %s36 = sshll.u32 [#allocation9], 4
      %s37 = int_to_ptr.vmem [resolvable:$true] %s36
      %42 = dma.hbm_to_vmem [thread:$0]  %s3, 512, %s37, [#allocation10], 128, 128, 8
    $region9: #{tpu_custom_call.1} parent=1 // pred_fallthru
      _
    // Predicated region
    $region10: #{tpu_custom_call.1} parent=1 // pred_check
      _
    $region11: #{tpu_custom_call.1} parent=1 // pred_check_branch
      %44 = sbr.rel (0) target = $region13
    $region12: #{tpu_custom_call.1} parent=1 // pred_region
      %45 = dma.done [#allocation8], 256
    $region13: #{tpu_custom_call.1} parent=1 // pred_fallthru
      _
    // Predicated region
    $region14: #{tpu_custom_call.1} parent=1 // pred_check
      _
    $region15: #{tpu_custom_call.1} parent=1 // pred_check_branch
      %47 = sbr.rel (0) target = $region17
    $region16: #{tpu_custom_call.1} parent=1 // pred_region
      %48 = dma.done [#allocation10], 512
    $region17: #{tpu_custom_call.1} parent=1 // pred_fallthru
      _
    %s49 = smul.u32 0, 8
    %s50 = sld [smem:[#allocation5 + %s49]]
    %s51 = sld [smem:[#allocation6 + %s49]]
    %s52 = scalar_lea.vmem [#allocation7], %s50
    %v53 = vld [vmem:[%s52] sm:$0x1]
    %vm54 = vcmask 253952
    %55 = vst.msk [vmem:[#allocation2] sm:$0x1] %vm54, %v53
    %s56 = scalar_lea.vmem [#allocation9], %s51
    %v57 = vld [vmem:[%s56] sm:$0x1]
    %58 = vst.msk [vmem:[#allocation3] sm:$0x1] %vm54, %v57
    %s59 = sadd.s32 %s49, 1
    %s60 = sld [smem:[#allocation5 + %s59]]
    %s61 = sld [smem:[#allocation6 + %s59]]
    %s62 = scalar_lea.vmem [#allocation7], %s60
    %v63 = vld [vmem:[%s62] sm:$0x1]
    %64 = vst.msk [vmem:[#allocation2 + $0x1] sm:$0x1] %vm54, %v63
    %s65 = scalar_lea.vmem [#allocation9], %s61
    %v66 = vld [vmem:[%s65] sm:$0x1]
    %67 = vst.msk [vmem:[#allocation3 + $0x1] sm:$0x1] %vm54, %v66
    %s68 = sadd.s32 %s49, 2
    %s69 = sld [smem:[#allocation5 + %s68]]
    %s70 = sld [smem:[#allocation6 + %s68]]
    %s71 = scalar_lea.vmem [#allocation7], %s69
    %v72 = vld [vmem:[%s71] sm:$0x1]
    %73 = vst.msk [vmem:[#allocation2 + $0x2] sm:$0x1] %vm54, %v72
    %s74 = scalar_lea.vmem [#allocation9], %s70
    %v75 = vld [vmem:[%s74] sm:$0x1]
    %76 = vst.msk [vmem:[#allocation3 + $0x2] sm:$0x1] %vm54, %v75
    %s77 = sadd.s32 %s49, 3
    %s78 = sld [smem:[#allocation5 + %s77]]
    %s79 = sld [smem:[#allocation6 + %s77]]
    %s80 = scalar_lea.vmem [#allocation7], %s78
    %v81 = vld [vmem:[%s80] sm:$0x1]
    %82 = vst.msk [vmem:[#allocation2 + $0x3] sm:$0x1] %vm54, %v81
    %s83 = scalar_lea.vmem [#allocation9], %s79
    %v84 = vld [vmem:[%s83] sm:$0x1]
    %85 = vst.msk [vmem:[#allocation3 + $0x3] sm:$0x1] %vm54, %v84
    %s86 = sadd.s32 %s49, 4
    %s87 = sld [smem:[#allocation5 + %s86]]
    %s88 = sld [smem:[#allocation6 + %s86]]
    %s89 = scalar_lea.vmem [#allocation7], %s87
    %v90 = vld [vmem:[%s89] sm:$0x1]
    %91 = vst.msk [vmem:[#allocation2 + $0x4] sm:$0x1] %vm54, %v90
    %s92 = scalar_lea.vmem [#allocation9], %s88
    %v93 = vld [vmem:[%s92] sm:$0x1]
    %94 = vst.msk [vmem:[#allocation3 + $0x4] sm:$0x1] %vm54, %v93
    %s95 = sadd.s32 %s49, 5
    %s96 = sld [smem:[#allocation5 + %s95]]
    %s97 = sld [smem:[#allocation6 + %s95]]
    %s98 = scalar_lea.vmem [#allocation7], %s96
    %v99 = vld [vmem:[%s98] sm:$0x1]
    %100 = vst.msk [vmem:[#allocation2 + $0x5] sm:$0x1] %vm54, %v99
    %s101 = scalar_lea.vmem [#allocation9], %s97
    %v102 = vld [vmem:[%s101] sm:$0x1]
    %103 = vst.msk [vmem:[#allocation3 + $0x5] sm:$0x1] %vm54, %v102
    %s104 = sadd.s32 %s49, 6
    %s105 = sld [smem:[#allocation5 + %s104]]
    %s106 = sld [smem:[#allocation6 + %s104]]
    %s107 = scalar_lea.vmem [#allocation7], %s105
    %v108 = vld [vmem:[%s107] sm:$0x1]
    %109 = vst.msk [vmem:[#allocation2 + $0x6] sm:$0x1] %vm54, %v108
    %s110 = scalar_lea.vmem [#allocation9], %s106
    %v111 = vld [vmem:[%s110] sm:$0x1]
    %112 = vst.msk [vmem:[#allocation3 + $0x6] sm:$0x1] %vm54, %v111
    %s113 = sadd.s32 %s49, 7
    %s114 = sld [smem:[#allocation5 + %s113]]
    %s115 = sld [smem:[#allocation6 + %s113]]
    %s116 = scalar_lea.vmem [#allocation7], %s114
    %v117 = vld [vmem:[%s116] sm:$0x1]
    %118 = vst.msk [vmem:[#allocation2 + $0x7] sm:$0x1] %vm54, %v117
    %s119 = scalar_lea.vmem [#allocation9], %s115
    %v120 = vld [vmem:[%s119] sm:$0x1]
    %121 = vst.msk [vmem:[#allocation3 + $0x7] sm:$0x1] %vm54, %v120
    %v122 = vld [vmem:[#allocation2] sm:$0xff]
    %v123 = vld [vmem:[#allocation3] sm:$0xff]
    %v124 = vmul.f32 %v122, %v123
    %vm125 = vcmask 261120
    %v126 = vsel %vm125, %v124, 0.0
    %127 = vadd.xlane.f32.xlu0 %v126
    %v128 = vpop.xlane.xlu0 %127
    %vm129 = vcmask 7168
    %130 = vst.msk [vmem:[%s4] sm:$0xff] %vm129, %v128
    // Predicated region
    $region18: #{tpu_custom_call.1} parent=1 // pred_check
      _
    $region19: #{tpu_custom_call.1} parent=1 // pred_check_branch
      %132 = sbr.rel (0) target = $region21
    $region20: #{tpu_custom_call.1} parent=1 // pred_region
      _
    $region21: #{tpu_custom_call.1} parent=1 // pred_fallthru
      _
    // Predicated region
    $region22: #{tpu_custom_call.1} parent=1 // pred_check
      _
    $region23: #{tpu_custom_call.1} parent=1 // pred_check_branch
      %134 = sbr.rel (0) target = $region25
    $region24: #{tpu_custom_call.1} parent=1 // pred_region
      _
    $region25: #{tpu_custom_call.1} parent=1 // pred_fallthru
      _
    %135 = vsyncpa [#allocation8], 1
    %136 = vsyncpa [#allocation10], 1

</llo_original>
